<compile_context>
chip_gen: v7x
topology: tpu7x:2x2x1
jax: 0.10.0
libtpu: 0.0.40
codegen_flags: <defaults>
</compile_context>

<pallas_src>
import functools

import jax
import jax.numpy as jnp
from jax import lax
from jax.experimental import pallas as pl
from jax.experimental.pallas import tpu as pltpu


def _round_up(a, m):
    return ((a + m - 1) // m) * m


def ncf_ctw_kernel(uidx_ref, vidx_ref, au_ref, av_ref, w2_ref, floor_ref,
                   out_ref):
    num_users = au_ref.shape[1]
    num_items = av_ref.shape[1]
    tb = out_ref.shape[1]

    u_idx = uidx_ref[...]            # [1, TB] int32
    v_idx = vidx_ref[...]            # [1, TB] int32

    # One-hot column selectors: batch on the lane axis, table rows on sublanes.
    u_oh = jnp.where(
        lax.broadcasted_iota(jnp.int32, (num_users, tb), 0) == u_idx,
        1.0, 0.0).astype(jnp.float32)                            # [NU, TB]
    v_oh = jnp.where(
        lax.broadcasted_iota(jnp.int32, (num_items, tb), 0) == v_idx,
        1.0, 0.0).astype(jnp.float32)                            # [NI, TB]

    # Fused gather + linear_1 (+ b1, folded into the user table) + scalar-bias
    # gather (row K of each table).  HIGHEST keeps f32 table values exact
    # through the MXU pass.
    u_full = jnp.dot(au_ref[...], u_oh,
                     precision=lax.Precision.HIGHEST,
                     preferred_element_type=jnp.float32)         # [K+1, TB]
    v_full = jnp.dot(av_ref[...], v_oh,
                     precision=lax.Precision.HIGHEST,
                     preferred_element_type=jnp.float32)         # [K+1, TB]

    pre = u_full + v_full                                        # [K+1, TB]

    # Masked ReLU: floor is 0 for the K hidden rows (-> relu) and -FLT_MAX for
    # the bias row (-> passthrough).
    h = jnp.maximum(pre, floor_ref[...])                         # [K+1, TB]

    # linear_2 + bias accumulation in one sublane reduce: w2_ext rows 0..K-1
    # are linear_2.weight, row K is 1.0 (bias passthrough).
    out_ref[...] = jnp.sum(h * w2_ref[...], axis=0, keepdims=True)   # [1, TB]


def ncf_ctw_forward(x, W_emb, H_emb, W1, b1, W2, user_bias, item_bias,
                    *, block_b=512):
    """Pallas-backed inference forward of NCF_CTW_1.

    x:          int32 [B, 2]   (user_idx, item_idx)
    W_emb:      f32 [num_users, K]
    H_emb:      f32 [num_items, K]
    W1:         f32 [K, 2K]    (PyTorch linear_1.weight, [out, in])
    b1:         f32 [K]
    W2:         f32 [1, K]     (PyTorch linear_2.weight, no bias)
    user_bias:  f32 [num_users, 1]
    item_bias:  f32 [num_items, 1]
    returns     f32 [B, 1]     (pre-sigmoid logits, like module.forward)
    """
    B = x.shape[0]
    num_users, K = W_emb.shape
    num_items = H_emb.shape[0]
    hp = lax.Precision.HIGHEST

    u_idx = x[:, 0].astype(jnp.int32)
    v_idx = x[:, 1].astype(jnp.int32)

    # ---- fold linear_1 (+ b1) and the scalar bias tables into lane-dense
    # ---- [K+1, rows] gather tables (one-time wrapper cost, tiny).
    w1_u = W1[:, :K]                                             # [K, K]
    w1_v = W1[:, K:]                                             # [K, K]
    A_u = jnp.dot(w1_u, W_emb.T, precision=hp) + b1[:, None]     # [K, NU]
    A_v = jnp.dot(w1_v, H_emb.T, precision=hp)                   # [K, NI]
    A_u_ext = jnp.concatenate(
        [A_u, user_bias.reshape(1, num_users)], axis=0)          # [K+1, NU]
    A_v_ext = jnp.concatenate(
        [A_v, item_bias.reshape(1, num_items)], axis=0)          # [K+1, NI]
    w2_ext = jnp.concatenate(
        [W2.reshape(K, 1), jnp.ones((1, 1), jnp.float32)], axis=0)   # [K+1, 1]
    relu_floor = jnp.concatenate(
        [jnp.zeros((K, 1), jnp.float32),
         jnp.full((1, 1), jnp.finfo(jnp.float32).min, jnp.float32)],
        axis=0)                                                  # [K+1, 1]

    # ---- batch tiling: always lane-aligned (multiple of 128), and >= 2 grid
    # ---- steps whenever B > 128 so both v7x TensorCores get work.
    if B <= 128:
        tb = 128
    else:
        half = _round_up((B + 1) // 2, 128)          # ceil(B/2), lane-aligned
        tb = min(max(_round_up(block_b, 128), 128), half)
    b_pad = _round_up(B, tb)
    if b_pad != B:
        pad = b_pad - B
        u_idx = jnp.concatenate([u_idx, jnp.zeros((pad,), jnp.int32)])
        v_idx = jnp.concatenate([v_idx, jnp.zeros((pad,), jnp.int32)])
    u_idx = u_idx.reshape(1, b_pad)
    v_idx = v_idx.reshape(1, b_pad)
    grid = (b_pad // tb,)

    # ---- explicit VMEM budget (tables + double-buffered tiles + one-hots).
    lane, sub = 128, 8
    tile_bytes = sub * tb * 4
    table_bytes = sub * (_round_up(num_users, lane)
                         + _round_up(num_items, lane)) * 4
    onehot_bytes = (_round_up(num_users, sub)
                    + _round_up(num_items, sub)) * tb * 4
    vmem_budget = (2 * 3 * tile_bytes        # idx tiles + out tile, 2-buffered
                   + 2 * table_bytes         # fused tables (default 2-buffered)
                   + 4 * sub * lane * 4      # w2_ext / relu_floor
                   + 2 * onehot_bytes        # one-hot intermediates + slack
                   + (4 << 20))              # headroom
    vmem_budget = int(min(max(vmem_budget, 16 << 20), 64 << 20))

    tile_spec = pl.BlockSpec((1, tb), lambda i: (0, i))

    def full(shape):
        return pl.BlockSpec(shape, lambda i: (0, 0))

    out_t = pl.pallas_call(
        ncf_ctw_kernel,
        out_shape=jax.ShapeDtypeStruct((1, b_pad), jnp.float32),
        grid=grid,
        in_specs=[
            tile_spec,                        # user indices    [1, TB]
            tile_spec,                        # item indices    [1, TB]
            full((K + 1, num_users)),         # fused user table
            full((K + 1, num_items)),         # fused item table
            full((K + 1, 1)),                 # [W2 ; 1]
            full((K + 1, 1)),                 # relu floor mask
        ],
        out_specs=tile_spec,
        compiler_params=pltpu.CompilerParams(
            dimension_semantics=("parallel",),
            vmem_limit_bytes=vmem_budget),
    )(u_idx, v_idx, A_u_ext, A_v_ext, w2_ext, relu_floor)

    return out_t[0, :B].reshape(B, 1)


def init_params(key, num_users, num_items, embedding_k):
    """Synthetic f32 params matching the PyTorch module's shapes."""
    ks = jax.random.split(key, 7)
    W_emb = jax.random.normal(ks[0], (num_users, embedding_k), jnp.float32)
    H_emb = jax.random.normal(ks[1], (num_items, embedding_k), jnp.float32)
    lim1 = 1.0 / jnp.sqrt(2.0 * embedding_k)
    W1 = jax.random.uniform(ks[2], (embedding_k, 2 * embedding_k),
                            jnp.float32, -lim1, lim1)
    b1 = jax.random.uniform(ks[3], (embedding_k,), jnp.float32, -lim1, lim1)
    lim2 = 1.0 / jnp.sqrt(float(embedding_k))
    W2 = jax.random.uniform(ks[4], (1, embedding_k), jnp.float32, -lim2, lim2)
    user_bias = jax.random.normal(ks[5], (num_users, 1), jnp.float32)
    item_bias = jax.random.normal(ks[6], (num_items, 1), jnp.float32)
    return W_emb, H_emb, W1, b1, W2, user_bias, item_bias


def reference_forward(x, W_emb, H_emb, W1, b1, W2, user_bias, item_bias):
    """Pure-JAX reference mirroring the PyTorch forward (inference path)."""
    u = x[:, 0]
    v = x[:, 1]
    U = jnp.take(W_emb, u, axis=0)
    V = jnp.take(H_emb, v, axis=0)
    z = jnp.concatenate([U, V], axis=1)
    h1 = jnp.maximum(
        jnp.dot(z, W1.T, precision=jax.lax.Precision.HIGHEST) + b1, 0.0)
    out = jnp.dot(h1, W2.T, precision=jax.lax.Precision.HIGHEST)
    return out + jnp.take(user_bias, u, axis=0) + jnp.take(item_bias, v, axis=0)


if __name__ == "__main__":
    num_users, num_items, embedding_k = 32, 48, 4
    batch = 256   # > 128 so the multi-step "parallel" grid path is exercised

    key = jax.random.PRNGKey(0)
    k_params, k_u, k_i = jax.random.split(key, 3)
    params = init_params(k_params, num_users, num_items, embedding_k)

    user_idx = jax.random.randint(k_u, (batch,), 0, num_users, jnp.int32)
    item_idx = jax.random.randint(k_i, (batch,), 0, num_items, jnp.int32)
    x = jnp.stack([user_idx, item_idx], axis=1)   # [B, 2] int32

    forward = jax.jit(functools.partial(ncf_ctw_forward, block_b=512))
    out = forward(x, *params)                     # grid = (2,), TB = 128
    out = jax.block_until_ready(out)

    ref = reference_forward(x, *params)
    assert out.shape == (batch, 1), out.shape
    max_err = float(jnp.max(jnp.abs(out - ref)))
    assert jnp.allclose(out, ref, atol=1e-4, rtol=1e-4), max_err

    print("KERNEL_OK")
</pallas_src>

<mosaic_0001>
module attributes {stable_mosaic.version = 11 : i64} {
  func.func @ncf_ctw_kernel(%arg0: i32, %arg1: memref<1x128xi32, #tpu.memory_space<vmem>>, %arg2: memref<1x128xi32, #tpu.memory_space<vmem>>, %arg3: memref<5x32xf32, #tpu.memory_space<vmem>>, %arg4: memref<5x48xf32, #tpu.memory_space<vmem>>, %arg5: memref<5x1xf32, #tpu.memory_space<vmem>>, %arg6: memref<5x1xf32, #tpu.memory_space<vmem>>, %arg7: memref<1x128xf32, #tpu.memory_space<vmem>>) attributes {dimension_semantics = [#tpu.dimension_semantics<parallel>], iteration_bounds = array<i64: 2>, scalar_prefetch = 0 : i64, scratch_operands = 0 : i64, tpu.core_type = #tpu.core_type<tc>, window_params = [{transform_indices = @transform_0, window_bounds = array<i64: 1, 128>}, {transform_indices = @transform_1, window_bounds = array<i64: 1, 128>}, {pipeline_mode = #tpu.pipeline_mode<synchronous>, transform_indices = @transform_2, window_bounds = array<i64: 5, 32>}, {pipeline_mode = #tpu.pipeline_mode<synchronous>, transform_indices = @transform_3, window_bounds = array<i64: 5, 48>}, {pipeline_mode = #tpu.pipeline_mode<synchronous>, transform_indices = @transform_4, window_bounds = array<i64: 5, 1>}, {pipeline_mode = #tpu.pipeline_mode<synchronous>, transform_indices = @transform_5, window_bounds = array<i64: 5, 1>}, {transform_indices = @transform_6, window_bounds = array<i64: 1, 128>}]} {
    %c0 = arith.constant 0 : index
    %c0_0 = arith.constant 0 : index
    %0 = vector.load %arg1[%c0, %c0_0] : memref<1x128xi32, #tpu.memory_space<vmem>>, vector<1x128xi32>
    %c0_1 = arith.constant 0 : index
    %c0_2 = arith.constant 0 : index
    %1 = vector.load %arg2[%c0_1, %c0_2] : memref<1x128xi32, #tpu.memory_space<vmem>>, vector<1x128xi32>
    %2 = tpu.iota {dimensions = array<i32: 0>} : vector<32x128xi32>
    %3 = vector.broadcast %0 : vector<1x128xi32> to vector<32x128xi32>
    %4 = arith.cmpi eq, %2, %3 : vector<32x128xi32>
    %cst = arith.constant 1.000000e+00 : f32
    %cst_3 = arith.constant 0.000000e+00 : f32
    %5 = vector.broadcast %cst : f32 to vector<32x128xf32>
    %6 = vector.broadcast %cst_3 : f32 to vector<32x128xf32>
    %7 = arith.select %4, %5, %6 : vector<32x128xi1>, vector<32x128xf32>
    %8 = tpu.iota {dimensions = array<i32: 0>} : vector<48x128xi32>
    %9 = vector.broadcast %1 : vector<1x128xi32> to vector<48x128xi32>
    %10 = arith.cmpi eq, %8, %9 : vector<48x128xi32>
    %cst_4 = arith.constant 1.000000e+00 : f32
    %cst_5 = arith.constant 0.000000e+00 : f32
    %11 = vector.broadcast %cst_4 : f32 to vector<48x128xf32>
    %12 = vector.broadcast %cst_5 : f32 to vector<48x128xf32>
    %13 = arith.select %10, %11, %12 : vector<48x128xi1>, vector<48x128xf32>
    %c0_6 = arith.constant 0 : index
    %c0_7 = arith.constant 0 : index
    %14 = vector.load %arg3[%c0_6, %c0_7] : memref<5x32xf32, #tpu.memory_space<vmem>>, vector<5x32xf32>
    %cst_8 = arith.constant dense<0.000000e+00> : vector<5x128xf32>
    %15 = tpu.matmul %14, %7, %cst_8 {dimension_numbers = #tpu.dot_dimension_numbers<[1], [0], [0], [1], [0, 0, 1, 1], [], []>, precision = #tpu.contract_precision<fp32>} : vector<5x32xf32>, vector<32x128xf32>, vector<5x128xf32> -> vector<5x128xf32>
    %c0_9 = arith.constant 0 : index
    %c0_10 = arith.constant 0 : index
    %16 = vector.load %arg4[%c0_9, %c0_10] : memref<5x48xf32, #tpu.memory_space<vmem>>, vector<5x48xf32>
    %cst_11 = arith.constant dense<0.000000e+00> : vector<5x128xf32>
    %17 = tpu.matmul %16, %13, %cst_11 {dimension_numbers = #tpu.dot_dimension_numbers<[1], [0], [0], [1], [0, 0, 1, 1], [], []>, precision = #tpu.contract_precision<fp32>} : vector<5x48xf32>, vector<48x128xf32>, vector<5x128xf32> -> vector<5x128xf32>
    %18 = arith.addf %15, %17 : vector<5x128xf32>
    %c0_12 = arith.constant 0 : index
    %c0_13 = arith.constant 0 : index
    %19 = vector.load %arg6[%c0_12, %c0_13] : memref<5x1xf32, #tpu.memory_space<vmem>>, vector<5x1xf32>
    %20 = vector.broadcast %19 : vector<5x1xf32> to vector<5x128xf32>
    %21 = arith.maximumf %18, %20 : vector<5x128xf32>
    %c0_14 = arith.constant 0 : index
    %c0_15 = arith.constant 0 : index
    %22 = vector.load %arg5[%c0_14, %c0_15] : memref<5x1xf32, #tpu.memory_space<vmem>>, vector<5x1xf32>
    %23 = vector.broadcast %22 : vector<5x1xf32> to vector<5x128xf32>
    %24 = arith.mulf %21, %23 : vector<5x128xf32>
    %cst_16 = arith.constant dense<0.000000e+00> : vector<128xf32>
    %25 = vector.multi_reduction <add>, %24, %cst_16 [0] : vector<5x128xf32> to vector<128xf32>
    %26 = vector.shape_cast %25 : vector<128xf32> to vector<1x128xf32>
    %c0_17 = arith.constant 0 : index
    %c0_18 = arith.constant 0 : index
    %27 = vector.load %arg7[%c0_17, %c0_18] : memref<1x128xf32, #tpu.memory_space<vmem>>, vector<1x128xf32>
    tpu.vector_store %arg7[%c0_17, %c0_18], %26 {strides = array<i32>} : memref<1x128xf32, #tpu.memory_space<vmem>>, vector<1x128xf32>,
    return
  }
  func.func @transform_0(%arg0: i32) -> (i32, i32) {
    %c0_i32 = arith.constant 0 : i32
    %c0_i32_0 = arith.constant 0 : i32
    return %c0_i32, %arg0 : i32, i32
  }
  func.func @transform_1(%arg0: i32) -> (i32, i32) {
    %c0_i32 = arith.constant 0 : i32
    %c0_i32_0 = arith.constant 0 : i32
    return %c0_i32, %arg0 : i32, i32
  }
  func.func @transform_2(%arg0: i32) -> (i32, i32) {
    %c0_i32 = arith.constant 0 : i32
    %c0_i32_0 = arith.constant 0 : i32
    %c0_i32_1 = arith.constant 0 : i32
    return %c0_i32, %c0_i32_0 : i32, i32
  }
  func.func @transform_3(%arg0: i32) -> (i32, i32) {
    %c0_i32 = arith.constant 0 : i32
    %c0_i32_0 = arith.constant 0 : i32
    %c0_i32_1 = arith.constant 0 : i32
    return %c0_i32, %c0_i32_0 : i32, i32
  }
  func.func @transform_4(%arg0: i32) -> (i32, i32) {
    %c0_i32 = arith.constant 0 : i32
    %c0_i32_0 = arith.constant 0 : i32
    %c0_i32_1 = arith.constant 0 : i32
    return %c0_i32, %c0_i32_0 : i32, i32
  }
  func.func @transform_5(%arg0: i32) -> (i32, i32) {
    %c0_i32 = arith.constant 0 : i32
    %c0_i32_0 = arith.constant 0 : i32
    %c0_i32_1 = arith.constant 0 : i32
    return %c0_i32, %c0_i32_0 : i32, i32
  }
  func.func @transform_6(%arg0: i32) -> (i32, i32) {
    %c0_i32 = arith.constant 0 : i32
    %c0_i32_0 = arith.constant 0 : i32
    return %c0_i32, %arg0 : i32, i32
  }
}

</mosaic_0001>

<llo_original>
// kernel: ncf_ctw_forward.1
$region0: #{ncf_ctw_forward.1}
  #allocation0 [shape = 'u32[]', space=smem, size = 0x4, offset = 0x4, fixed_abs, tag = 'smem constant byte address 0x4 - core index']
  #allocation1 [shape = 'u32[144,128]{1,0:T(1,128)}', space=vmem, size = 0x12000, scoped, tag = 'internal scratch']
  %s0 = inlined_call_operand.vmem [shape: s32[1,256], index: 0, kind: input, shape index: {}]
  %s1 = inlined_call_operand.vmem [shape: s32[1,256], index: 1, kind: input, shape index: {}]
  %s2 = inlined_call_operand.vmem [shape: f32[5,32], index: 2, kind: input, shape index: {}]
  %s3 = inlined_call_operand.vmem [shape: f32[5,48], index: 3, kind: input, shape index: {}]
  %s4 = inlined_call_operand.vmem [shape: f32[5,1], index: 4, kind: input, shape index: {}]
  %s5 = inlined_call_operand.vmem [shape: f32[5,1], index: 5, kind: input, shape index: {}]
  %s6 = inlined_call_operand.hbm [shape: f32[1,256], index: 6, kind: output, shape index: {}]
  %s7 = sld [smem:[#allocation0]]
  $region57: #{ncf_ctw_forward.1} parent=0
    _
  %s9 = ssub.s32 1, %s7
  %s10 = scalar_select 0, %s9, %s7
  $region1: #{ncf_ctw_forward.1} parent=0
    #allocation2 [shape = 'u8[1024]{0}', space=vmem, size = 0x400, scoped, tag = 'output window, operand 0']
    #allocation3 [shape = 's32[2]{0}', space=sflag, size = 0x8, scoped, tag = 'scoped memory for ncf_ctw_forward.1']
    %11 = vsyncpa [#allocation3], 0
    %s12 = scalar_lea.sflag [#allocation3], 1
    %13 = vsyncpa %s12, 0
    loop: start=0, step=1, limit=4
    $region2: #{ncf_ctw_forward.1} parent=1 // loop_pre_header
      _
    $region3: #{ncf_ctw_forward.1} parent=1 // loop_header
      %s15 = sphi 0, %s19
      %p16 = scmp.ge.s32.totalorder %s15, 4
      %s25 = sphi 0, %s27
      %s28 = sphi 0, %s25
      %s29 = sphi 0, %s28
      %s45 = sphi 0, %s29
      %s51 = sphi 0, %s53
      %s54 = sphi 0, %s51
      %s55 = sphi 0, %s54
      %s71 = sphi 0, %s55
      %s75 = sphi 0, %s75
      %s77 = sphi 0, %s75
      %s78 = sphi 0, %s77
      %s92 = sphi 0, %s78
      %s96 = sphi 0, %s96
      %s98 = sphi 0, %s96
      %s99 = sphi 0, %s98
      %s113 = sphi 0, %s99
      %s117 = sphi 0, %s117
      %s119 = sphi 0, %s117
      %s120 = sphi 0, %s119
      %s134 = sphi 0, %s120
      %s138 = sphi 0, %s138
      %s140 = sphi 0, %s138
      %s141 = sphi 0, %s140
      %s155 = sphi 0, %s141
      %s161 = sphi 0, %s163
      %s164 = sphi 0, %s161
      %s165 = sphi 0, %s164
      %s181 = sphi 0, %s165
    $region4: #{ncf_ctw_forward.1} parent=1 // loop_header_branch
      %18 = sbr.rel (%p16) target = $region8
    $region5: #{ncf_ctw_forward.1} parent=1 // loop_body
      %s20 = ssub.s32 %s15, 1
      %s21 = ssub.s32 %s15, 2
      %s22 = sadd.s32 %s15, 1
      %s23 = ssub.s32 %s15, %s22
      %p24 = scmp.eq.s32.totalorder %s23, 0
      %s26 = sadd.s32 %s25, 1
      %s27 = scalar_select %p24, %s25, %s26
      %p30 = pneg %p24
      %p31 = scmp.eq.s32.totalorder %s15, 1
      %p32 = por %p30, %p31
      %p33 = scmp.ne.s32.totalorder %s25, %s28
      %p34 = scmp.eq.s32.totalorder %s15, 0
      %p35 = por %p33, %p34
      %p36 = scmp.ne.s32.totalorder %s25, %s28
      %p37 = scmp.eq.s32.totalorder %s20, 1
      %p38 = por %p36, %p37
      %p39 = scmp.ne.s32.totalorder %s28, %s29
      %p40 = scmp.eq.s32.totalorder %s20, 0
      %p41 = por %p39, %p40
      %p42 = scmp.ne.s32.totalorder %s28, %s29
      %p43 = scmp.eq.s32.totalorder %s21, 1
      %p44 = por %p42, %p43
      %p46 = scmp.ne.s32.totalorder %s29, %s45
      %p47 = scmp.eq.s32.totalorder %s21, 0
      %p48 = por %p46, %p47
      %s49 = ssub.s32 %s15, %s22
      %p50 = scmp.eq.s32.totalorder %s49, 0
      %s52 = sadd.s32 %s51, 1
      %s53 = scalar_select %p50, %s51, %s52
      %p56 = pneg %p50
      %p57 = scmp.eq.s32.totalorder %s15, 1
      %p58 = por %p56, %p57
      %p59 = scmp.ne.s32.totalorder %s51, %s54
      %p60 = scmp.eq.s32.totalorder %s15, 0
      %p61 = por %p59, %p60
      %p62 = scmp.ne.s32.totalorder %s51, %s54
      %p63 = scmp.eq.s32.totalorder %s20, 1
      %p64 = por %p62, %p63
      %p65 = scmp.ne.s32.totalorder %s54, %s55
      %p66 = scmp.eq.s32.totalorder %s20, 0
      %p67 = por %p65, %p66
      %p68 = scmp.ne.s32.totalorder %s54, %s55
      %p69 = scmp.eq.s32.totalorder %s21, 1
      %p70 = por %p68, %p69
      %p72 = scmp.ne.s32.totalorder %s55, %s71
      %p73 = scmp.eq.s32.totalorder %s21, 0
      %p74 = por %p72, %p73
      %s76 = sadd.s32 %s75, 1
      %p79 = scmp.eq.s32.totalorder %s15, 1
      %p80 = scmp.ne.s32.totalorder %s75, %s77
      %p81 = scmp.eq.s32.totalorder %s15, 0
      %p82 = por %p80, %p81
      %p83 = scmp.ne.s32.totalorder %s75, %s77
      %p84 = scmp.eq.s32.totalorder %s20, 1
      %p85 = por %p83, %p84
      %p86 = scmp.ne.s32.totalorder %s77, %s78
      %p87 = scmp.eq.s32.totalorder %s20, 0
      %p88 = por %p86, %p87
      %p89 = scmp.ne.s32.totalorder %s77, %s78
      %p90 = scmp.eq.s32.totalorder %s21, 1
      %p91 = por %p89, %p90
      %p93 = scmp.ne.s32.totalorder %s78, %s92
      %p94 = scmp.eq.s32.totalorder %s21, 0
      %p95 = por %p93, %p94
      %s97 = sadd.s32 %s96, 1
      %p100 = scmp.eq.s32.totalorder %s15, 1
      %p101 = scmp.ne.s32.totalorder %s96, %s98
      %p102 = scmp.eq.s32.totalorder %s15, 0
      %p103 = por %p101, %p102
      %p104 = scmp.ne.s32.totalorder %s96, %s98
      %p105 = scmp.eq.s32.totalorder %s20, 1
      %p106 = por %p104, %p105
      %p107 = scmp.ne.s32.totalorder %s98, %s99
      %p108 = scmp.eq.s32.totalorder %s20, 0
      %p109 = por %p107, %p108
      %p110 = scmp.ne.s32.totalorder %s98, %s99
      %p111 = scmp.eq.s32.totalorder %s21, 1
      %p112 = por %p110, %p111
      %p114 = scmp.ne.s32.totalorder %s99, %s113
      %p115 = scmp.eq.s32.totalorder %s21, 0
      %p116 = por %p114, %p115
      %s118 = sadd.s32 %s117, 1
      %p121 = scmp.eq.s32.totalorder %s15, 1
      %p122 = scmp.ne.s32.totalorder %s117, %s119
      %p123 = scmp.eq.s32.totalorder %s15, 0
      %p124 = por %p122, %p123
      %p125 = scmp.ne.s32.totalorder %s117, %s119
      %p126 = scmp.eq.s32.totalorder %s20, 1
      %p127 = por %p125, %p126
      %p128 = scmp.ne.s32.totalorder %s119, %s120
      %p129 = scmp.eq.s32.totalorder %s20, 0
      %p130 = por %p128, %p129
      %p131 = scmp.ne.s32.totalorder %s119, %s120
      %p132 = scmp.eq.s32.totalorder %s21, 1
      %p133 = por %p131, %p132
      %p135 = scmp.ne.s32.totalorder %s120, %s134
      %p136 = scmp.eq.s32.totalorder %s21, 0
      %p137 = por %p135, %p136
      %s139 = sadd.s32 %s138, 1
      %p142 = scmp.eq.s32.totalorder %s15, 1
      %p143 = scmp.ne.s32.totalorder %s138, %s140
      %p144 = scmp.eq.s32.totalorder %s15, 0
      %p145 = por %p143, %p144
      %p146 = scmp.ne.s32.totalorder %s138, %s140
      %p147 = scmp.eq.s32.totalorder %s20, 1
      %p148 = por %p146, %p147
      %p149 = scmp.ne.s32.totalorder %s140, %s141
      %p150 = scmp.eq.s32.totalorder %s20, 0
      %p151 = por %p149, %p150
      %p152 = scmp.ne.s32.totalorder %s140, %s141
      %p153 = scmp.eq.s32.totalorder %s21, 1
      %p154 = por %p152, %p153
      %p156 = scmp.ne.s32.totalorder %s141, %s155
      %p157 = scmp.eq.s32.totalorder %s21, 0
      %p158 = por %p156, %p157
      %s159 = ssub.s32 %s15, %s22
      %p160 = scmp.eq.s32.totalorder %s159, 0
      %s162 = sadd.s32 %s161, 1
      %s163 = scalar_select %p160, %s161, %s162
      %p166 = pneg %p160
      %p167 = scmp.eq.s32.totalorder %s15, 1
      %p168 = por %p166, %p167
      %p169 = scmp.ne.s32.totalorder %s161, %s164
      %p170 = scmp.eq.s32.totalorder %s15, 0
      %p171 = por %p169, %p170
      %p172 = scmp.ne.s32.totalorder %s161, %s164
      %p173 = scmp.eq.s32.totalorder %s20, 1
      %p174 = por %p172, %p173
      %p175 = scmp.ne.s32.totalorder %s164, %s165
      %p176 = scmp.eq.s32.totalorder %s20, 0
      %p177 = por %p175, %p176
      %p178 = scmp.ne.s32.totalorder %s164, %s165
      %p179 = scmp.eq.s32.totalorder %s21, 1
      %p180 = por %p178, %p179
      %p182 = scmp.ne.s32.totalorder %s165, %s181
      %p183 = scmp.eq.s32.totalorder %s21, 0
      %p184 = por %p182, %p183
      %p185 = scmp.le.s32.totalorder 1, %s15
      %p186 = scmp.lt.s32.totalorder %s15, 3
      %p187 = pnand %p185, %p186
      %p188 = pneg %p187
      // Predicated region
      $region9: #{ncf_ctw_forward.1} parent=5 // pred_check
        _
      $region10: #{ncf_ctw_forward.1} parent=5 // pred_check_branch
        %190 = sbr.rel (%p187) target = $region12
      $region11: #{ncf_ctw_forward.1} parent=5 // pred_region
        %s191 = ssub.s32 %s15, 1
        // Predicated region
        $region13: #{ncf_ctw_forward.1} parent=11 // pred_check
          %p192 = pneg %p88
        $region14: #{ncf_ctw_forward.1} parent=11 // pred_check_branch
          %194 = sbr.rel (%p192) target = $region16
        $region15: #{ncf_ctw_forward.1} parent=11 // pred_region
          _
        $region16: #{ncf_ctw_forward.1} parent=11 // pred_fallthru
          _
        // Predicated region
        $region17: #{ncf_ctw_forward.1} parent=11 // pred_check
          %p195 = pneg %p109
        $region18: #{ncf_ctw_forward.1} parent=11 // pred_check_branch
          %197 = sbr.rel (%p195) target = $region20
        $region19: #{ncf_ctw_forward.1} parent=11 // pred_region
          _
        $region20: #{ncf_ctw_forward.1} parent=11 // pred_fallthru
          _
        // Predicated region
        $region21: #{ncf_ctw_forward.1} parent=11 // pred_check
          %p198 = pneg %p130
        $region22: #{ncf_ctw_forward.1} parent=11 // pred_check_branch
          %200 = sbr.rel (%p198) target = $region24
        $region23: #{ncf_ctw_forward.1} parent=11 // pred_region
          _
        $region24: #{ncf_ctw_forward.1} parent=11 // pred_fallthru
          _
        // Predicated region
        $region25: #{ncf_ctw_forward.1} parent=11 // pred_check
          %p201 = pneg %p151
        $region26: #{ncf_ctw_forward.1} parent=11 // pred_check_branch
          %203 = sbr.rel (%p201) target = $region28
        $region27: #{ncf_ctw_forward.1} parent=11 // pred_region
          _
        $region28: #{ncf_ctw_forward.1} parent=11 // pred_fallthru
          _
      $region12: #{ncf_ctw_forward.1} parent=5 // pred_fallthru
        _
      %p204 = scmp.lt.s32.totalorder %s15, 2
      // Predicated region
      $region29: #{ncf_ctw_forward.1} parent=5 // pred_check
        %p205 = pneg %p204
      $region30: #{ncf_ctw_forward.1} parent=5 // pred_check_branch
        %207 = sbr.rel (%p205) target = $region32
      $region31: #{ncf_ctw_forward.1} parent=5 // pred_region
        // Predicated region
        $region33: #{ncf_ctw_forward.1} parent=31 // pred_check
          %p208 = pneg %p35
        $region34: #{ncf_ctw_forward.1} parent=31 // pred_check_branch
          %210 = sbr.rel (%p208) target = $region36
        $region35: #{ncf_ctw_forward.1} parent=31 // pred_region
          %p211 = scmp.lt.s32.totalorder %s15, 1
          %s212 = scalar_select %p211, %s15, 1
          %s213 = scalar_lea.vmem %s0, %s212
        $region36: #{ncf_ctw_forward.1} parent=31 // pred_fallthru
          _
        // Predicated region
        $region37: #{ncf_ctw_forward.1} parent=31 // pred_check
          %p214 = pneg %p61
        $region38: #{ncf_ctw_forward.1} parent=31 // pred_check_branch
          %216 = sbr.rel (%p214) target = $region40
        $region39: #{ncf_ctw_forward.1} parent=31 // pred_region
          %p217 = scmp.lt.s32.totalorder %s15, 1
          %s218 = scalar_select %p217, %s15, 1
          %s219 = scalar_lea.vmem %s1, %s218
        $region40: #{ncf_ctw_forward.1} parent=31 // pred_fallthru
          _
      $region32: #{ncf_ctw_forward.1} parent=5 // pred_fallthru
        _
      %p220 = scmp.le.s32.totalorder 1, %s15
      %p221 = scmp.lt.s32.totalorder %s15, 3
      %p222 = pnand %p220, %p221
      %p223 = pneg %p222
      // Predicated region
      $region41: #{ncf_ctw_forward.1} parent=5 // pred_check
        _
      $region42: #{ncf_ctw_forward.1} parent=5 // pred_check_branch
        %225 = sbr.rel (%p222) target = $region44
      $region43: #{ncf_ctw_forward.1} parent=5 // pred_region
        %s226 = ssub.s32 %s15, 1
        %p227 = scmp.lt.s32.totalorder %s20, 1
        %s228 = scalar_select %p227, %s20, 1
        %s229 = scalar_lea.vmem %s0, %s228
        %p230 = pneg %p41
        %p231 = pneg %p38
        %p232 = scmp.lt.s32.totalorder %s20, 1
        %s233 = scalar_select %p232, %s20, 1
        %s234 = scalar_lea.vmem %s1, %s233
        %p235 = pneg %p67
        %p236 = pneg %p64
        %p237 = pneg %p88
        %p238 = pneg %p85
        %p239 = pneg %p109
        %p240 = pneg %p106
        %p241 = pneg %p130
        %p242 = pneg %p127
        %p243 = pneg %p151
        %p244 = pneg %p148
        %p245 = pneg %p177
        %p246 = pneg %p174
        %s247 = sand.u32 %s164, 1
        %s248 = scalar_lea.sflag [#allocation3], %s247
        %s249 = sand.u32 %s164, 1
        %s250 = scalar_lea.vmem [#allocation2], %s249
        %p251 = scmp.lt.s32.totalorder %s20, 1
        %s252 = scalar_select %p251, %s20, 1
        %s253 = scalar_lea.vmem %s0, %s252
        %p254 = scmp.lt.s32.totalorder %s20, 1
        %s255 = scalar_select %p254, %s20, 1
        %s256 = scalar_lea.vmem %s1, %s255
        %v257 = vld [vmem:[%s253] sm:$0x1]
        %v258 = vld [vmem:[%s256] sm:$0x1]
        %v259 = vlaneseq
        %v260 = vshrl.u32 %v259, 7
        %v261 = vadd.s32 %v260, 8
        %v262 = vadd.s32 %v260, 16
        %v263 = vadd.s32 %v260, 24
        %v264 = vlaneseq
        %v265 = vshrl.u32 %v264, 7
        %v266 = vsub.s32 0, %v265
        %v267 = vrot.slane %v257, %v266
        %vm268 = vcmp.eq.s32.totalorder %v260, %v267
        %vm269 = vcmp.eq.s32.totalorder %v261, %v267
        %vm270 = vcmp.eq.s32.totalorder %v262, %v267
        %vm271 = vcmp.eq.s32.totalorder %v263, %v267
        %v272 = vsel %vm268, 1.0, 0.0
        %v273 = vsel %vm269, 1.0, 0.0
        %v274 = vsel %vm270, 1.0, 0.0
        %v275 = vsel %vm271, 1.0, 0.0
        %v276 = vadd.s32 %v260, 32
        %v277 = vadd.s32 %v260, 40
        %v278 = vlaneseq
        %v279 = vshrl.u32 %v278, 7
        %v280 = vsub.s32 0, %v279
        %v281 = vrot.slane %v258, %v280
        %vm282 = vcmp.eq.s32.totalorder %v260, %v281
        %vm283 = vcmp.eq.s32.totalorder %v261, %v281
        %vm284 = vcmp.eq.s32.totalorder %v262, %v281
        %vm285 = vcmp.eq.s32.totalorder %v263, %v281
        %vm286 = vcmp.eq.s32.totalorder %v276, %v281
        %vm287 = vcmp.eq.s32.totalorder %v277, %v281
        %v288 = vsel %vm282, 1.0, 0.0
        %v289 = vsel %vm283, 1.0, 0.0
        %v290 = vsel %vm284, 1.0, 0.0
        %v291 = vsel %vm285, 1.0, 0.0
        %v292 = vsel %vm286, 1.0, 0.0
        %v293 = vsel %vm287, 1.0, 0.0
        %v294 = vld [vmem:[%s2] sm:$0x1f]
        %v295 = vld [vmem:[%s3] sm:$0x1f]
        %vm296 = vcmask 392192
        %v298 = vsel %vm296, %v295, 0
        %300 = vmatprep.subr.mxu0 0.0
        %301 = vmatpush1.msra.mxu0 %v288
        %302 = vmatprep.subr.mxu0 0.0
        %303 = vmatpush1.msra.mxu0 %v289
        %304 = vmatprep.subr.mxu0 0.0
        %305 = vmatpush1.msra.mxu0 %v290
        %306 = vmatprep.subr.mxu0 0.0
        %307 = vmatpush1.msra.mxu0 %v291
        %308 = vmatprep.subr.mxu0 0.0
        %309 = vmatpush1.msra.mxu0 %v292
        %310 = vmatprep.subr.mxu0 0.0
        %311 = vmatpush1.msra.mxu0 %v293
        %312 = vmatprep.subr.mxu0 0.0
        %313 = vmatpush1.msra.mxu0 0.0
        %314 = vmatprep.subr.mxu0 0.0
        %315 = vmatpush1.msra.mxu0 0.0
        %316 = vmatprep.subr.mxu0 0.0
        %317 = vmatpush1.msra.mxu0 0.0
        %318 = vmatprep.subr.mxu0 0.0
        %319 = vmatpush1.msra.mxu0 0.0
        %320 = vmatprep.subr.mxu0 0.0
        %321 = vmatpush1.msra.mxu0 0.0
        %322 = vmatprep.subr.mxu0 0.0
        %323 = vmatpush1.msra.mxu0 0.0
        %324 = vmatprep.subr.mxu0 0.0
        %325 = vmatpush1.msra.mxu0 0.0
        %326 = vmatprep.subr.mxu0 0.0
        %327 = vmatpush1.msra.mxu0 0.0
        %328 = vmatprep.subr.mxu0 0.0
        %329 = vmatpush1.msra.mxu0 0.0
        %330 = vmatprep.subr.mxu0 0.0
        %331 = vmatpush1.msra.mxu0 0.0
        %332 = vmatprep.subr.mxu0 0.0
        %333 = vmatpush1.msra.mxu0 0.0
        %334 = vmatprep.subr.mxu0 0.0
        %335 = vmatpush1.msra.mxu0 0.0
        %336 = vmatprep.subr.mxu0 0.0
        %337 = vmatpush1.msra.mxu0 0.0
        %338 = vmatprep.subr.mxu0 0.0
        %339 = vmatpush1.msra.mxu0 0.0
        %340 = vmatprep.subr.mxu0 0.0
        %341 = vmatpush1.msra.mxu0 0.0
        %342 = vmatprep.subr.mxu0 0.0
        %343 = vmatpush1.msra.mxu0 0.0
        %344 = vmatprep.subr.mxu0 0.0
        %345 = vmatpush1.msra.mxu0 0.0
        %346 = vmatprep.subr.mxu0 0.0
        %347 = vmatpush1.msra.mxu0 0.0
        %348 = vmatprep.subr.mxu0 0.0
        %349 = vmatpush1.msra.mxu0 0.0
        %350 = vmatprep.subr.mxu0 0.0
        %351 = vmatpush1.msra.mxu0 0.0
        %352 = vmatprep.subr.mxu0 0.0
        %353 = vmatpush1.msra.mxu0 0.0
        %354 = vmatprep.subr.mxu0 0.0
        %355 = vmatpush1.msra.mxu0 0.0
        %356 = vmatprep.subr.mxu0 0.0
        %357 = vmatpush1.msra.mxu0 0.0
        %358 = vmatprep.subr.mxu0 0.0
        %359 = vmatpush1.msra.mxu0 0.0
        %360 = vmatprep.subr.mxu0 0.0
        %361 = vmatpush1.msra.mxu0 0.0
        %362 = vmatprep.subr.mxu0 0.0
        %363 = vmatpush1.msra.mxu0 0.0
        %364 = vmatprep.mubr.f32.mxu0 0.0
        %v365 = vand.u32 %v298, 4294901760
        %v366 = vsub.f32 %v298, %v365
        %v367 = vand.u32 %v366, 4294901760
        %v368 = vsub.f32 %v366, %v367
        %v369 = vand.u32 %v368, 4294901760
        %370 = vmatmul.mubr.f32.gmra.mrb[0].mxu0 %v369
        %v371 = vpop.f32.mrb[0].mxu0
        %v372 = vadd.f32 0.0, %v371
        %v373 = vpop.f32.mrb[0].mxu0
        %374 = vdwg.mxu0
        %375 = vmatprep.subr.mxu0 0.0
        %v376 = vsub.f32 %v288, %v288
        %v377 = vand.u32 %v376, 4294901760
        %v378 = vsub.f32 %v376, %v377
        %v379 = vand.u32 %v378, 4294901760
        %380 = vmatpush1.msra.mxu0 %v379
        %381 = vmatprep.subr.mxu0 0.0
        %v382 = vsub.f32 %v289, %v289
        %v383 = vand.u32 %v382, 4294901760
        %v384 = vsub.f32 %v382, %v383
        %v385 = vand.u32 %v384, 4294901760
        %386 = vmatpush1.msra.mxu0 %v385
        %387 = vmatprep.subr.mxu0 0.0
        %v388 = vsub.f32 %v290, %v290
        %v389 = vand.u32 %v388, 4294901760
        %v390 = vsub.f32 %v388, %v389
        %v391 = vand.u32 %v390, 4294901760
        %392 = vmatpush1.msra.mxu0 %v391
        %393 = vmatprep.subr.mxu0 0.0
        %v394 = vsub.f32 %v291, %v291
        %v395 = vand.u32 %v394, 4294901760
        %v396 = vsub.f32 %v394, %v395
        %v397 = vand.u32 %v396, 4294901760
        %398 = vmatpush1.msra.mxu0 %v397
        %399 = vmatprep.subr.mxu0 0.0
        %v400 = vsub.f32 %v292, %v292
        %v401 = vand.u32 %v400, 4294901760
        %v402 = vsub.f32 %v400, %v401
        %v403 = vand.u32 %v402, 4294901760
        %404 = vmatpush1.msra.mxu0 %v403
        %405 = vmatprep.subr.mxu0 0.0
        %v406 = vsub.f32 %v293, %v293
        %v407 = vand.u32 %v406, 4294901760
        %v408 = vsub.f32 %v406, %v407
        %v409 = vand.u32 %v408, 4294901760
        %410 = vmatpush1.msra.mxu0 %v409
        %411 = vmatprep.subr.mxu0 0.0
        %412 = vmatpush1.msra.mxu0 0.0
        %413 = vmatprep.subr.mxu0 0.0
        %414 = vmatpush1.msra.mxu0 0.0
        %415 = vmatprep.subr.mxu0 0.0
        %416 = vmatpush1.msra.mxu0 0.0
        %417 = vmatprep.subr.mxu0 0.0
        %418 = vmatpush1.msra.mxu0 0.0
        %419 = vmatprep.subr.mxu0 0.0
        %420 = vmatpush1.msra.mxu0 0.0
        %421 = vmatprep.subr.mxu0 0.0
        %422 = vmatpush1.msra.mxu0 0.0
        %423 = vmatprep.subr.mxu0 0.0
        %424 = vmatpush1.msra.mxu0 0.0
        %425 = vmatprep.subr.mxu0 0.0
        %426 = vmatpush1.msra.mxu0 0.0
        %427 = vmatprep.subr.mxu0 0.0
        %428 = vmatpush1.msra.mxu0 0.0
        %429 = vmatprep.subr.mxu0 0.0
        %430 = vmatpush1.msra.mxu0 0.0
        %431 = vmatprep.subr.mxu0 0.0
        %432 = vmatpush1.msra.mxu0 0.0
        %433 = vmatprep.subr.mxu0 0.0
        %434 = vmatpush1.msra.mxu0 0.0
        %435 = vmatprep.subr.mxu0 0.0
        %436 = vmatpush1.msra.mxu0 0.0
        %437 = vmatprep.subr.mxu0 0.0
        %438 = vmatpush1.msra.mxu0 0.0
        %439 = vmatprep.subr.mxu0 0.0
        %440 = vmatpush1.msra.mxu0 0.0
        %441 = vmatprep.subr.mxu0 0.0
        %442 = vmatpush1.msra.mxu0 0.0
        %443 = vmatprep.subr.mxu0 0.0
        %444 = vmatpush1.msra.mxu0 0.0
        %445 = vmatprep.subr.mxu0 0.0
        %446 = vmatpush1.msra.mxu0 0.0
        %447 = vmatprep.subr.mxu0 0.0
        %448 = vmatpush1.msra.mxu0 0.0
        %449 = vmatprep.subr.mxu0 0.0
        %450 = vmatpush1.msra.mxu0 0.0
        %451 = vmatprep.subr.mxu0 0.0
        %452 = vmatpush1.msra.mxu0 0.0
        %453 = vmatprep.subr.mxu0 0.0
        %454 = vmatpush1.msra.mxu0 0.0
        %455 = vmatprep.subr.mxu0 0.0
        %456 = vmatpush1.msra.mxu0 0.0
        %457 = vmatprep.subr.mxu0 0.0
        %458 = vmatpush1.msra.mxu0 0.0
        %459 = vmatprep.subr.mxu0 0.0
        %460 = vmatpush1.msra.mxu0 0.0
        %461 = vmatprep.subr.mxu0 0.0
        %462 = vmatpush1.msra.mxu0 0.0
        %463 = vmatprep.mubr.f32.mxu0 0.0
        %v464 = vand.u32 %v298, 4294901760
        %465 = vmatmul.mubr.f32.gmra.mrb[0].mxu0 %v464
        %v466 = vpop.f32.mrb[0].mxu0
        %v467 = vadd.f32 %v372, %v466
        %v468 = vpop.f32.mrb[0].mxu0
        %469 = vdwg.mxu0
        %470 = vmatprep.subr.mxu0 0.0
        %v471 = vsub.f32 %v288, %v288
        %472 = vmatpush1.msra.mxu0 %v471
        %473 = vmatprep.subr.mxu0 0.0
        %v474 = vsub.f32 %v289, %v289
        %475 = vmatpush1.msra.mxu0 %v474
        %476 = vmatprep.subr.mxu0 0.0
        %v477 = vsub.f32 %v290, %v290
        %478 = vmatpush1.msra.mxu0 %v477
        %479 = vmatprep.subr.mxu0 0.0
        %v480 = vsub.f32 %v291, %v291
        %481 = vmatpush1.msra.mxu0 %v480
        %482 = vmatprep.subr.mxu0 0.0
        %v483 = vsub.f32 %v292, %v292
        %484 = vmatpush1.msra.mxu0 %v483
        %485 = vmatprep.subr.mxu0 0.0
        %v486 = vsub.f32 %v293, %v293
        %487 = vmatpush1.msra.mxu0 %v486
        %488 = vmatprep.subr.mxu0 0.0
        %489 = vmatpush1.msra.mxu0 0.0
        %490 = vmatprep.subr.mxu0 0.0
        %491 = vmatpush1.msra.mxu0 0.0
        %492 = vmatprep.subr.mxu0 0.0
        %493 = vmatpush1.msra.mxu0 0.0
        %494 = vmatprep.subr.mxu0 0.0
        %495 = vmatpush1.msra.mxu0 0.0
        %496 = vmatprep.subr.mxu0 0.0
        %497 = vmatpush1.msra.mxu0 0.0
        %498 = vmatprep.subr.mxu0 0.0
        %499 = vmatpush1.msra.mxu0 0.0
        %500 = vmatprep.subr.mxu0 0.0
        %501 = vmatpush1.msra.mxu0 0.0
        %502 = vmatprep.subr.mxu0 0.0
        %503 = vmatpush1.msra.mxu0 0.0
        %504 = vmatprep.subr.mxu0 0.0
        %505 = vmatpush1.msra.mxu0 0.0
        %506 = vmatprep.subr.mxu0 0.0
        %507 = vmatpush1.msra.mxu0 0.0
        %508 = vmatprep.subr.mxu0 0.0
        %509 = vmatpush1.msra.mxu0 0.0
        %510 = vmatprep.subr.mxu0 0.0
        %511 = vmatpush1.msra.mxu0 0.0
        %512 = vmatprep.subr.mxu0 0.0
        %513 = vmatpush1.msra.mxu0 0.0
        %514 = vmatprep.subr.mxu0 0.0
        %515 = vmatpush1.msra.mxu0 0.0
        %516 = vmatprep.subr.mxu0 0.0
        %517 = vmatpush1.msra.mxu0 0.0
        %518 = vmatprep.subr.mxu0 0.0
        %519 = vmatpush1.msra.mxu0 0.0
        %520 = vmatprep.subr.mxu0 0.0
        %521 = vmatpush1.msra.mxu0 0.0
        %522 = vmatprep.subr.mxu0 0.0
        %523 = vmatpush1.msra.mxu0 0.0
        %524 = vmatprep.subr.mxu0 0.0
        %525 = vmatpush1.msra.mxu0 0.0
        %526 = vmatprep.subr.mxu0 0.0
        %527 = vmatpush1.msra.mxu0 0.0
        %528 = vmatprep.subr.mxu0 0.0
        %529 = vmatpush1.msra.mxu0 0.0
        %530 = vmatprep.subr.mxu0 0.0
        %531 = vmatpush1.msra.mxu0 0.0
        %532 = vmatprep.subr.mxu0 0.0
        %533 = vmatpush1.msra.mxu0 0.0
        %534 = vmatprep.subr.mxu0 0.0
        %535 = vmatpush1.msra.mxu0 0.0
        %536 = vmatprep.subr.mxu0 0.0
        %537 = vmatpush1.msra.mxu0 0.0
        %538 = vmatprep.subr.mxu0 0.0
        %539 = vmatpush1.msra.mxu0 0.0
        %540 = vmatprep.mubr.f32.mxu0 0.0
        %v541 = vand.u32 %v298, 4294901760
        %v542 = vsub.f32 %v298, %v541
        %543 = vmatmul.mubr.f32.gmra.mrb[0].mxu0 %v542
        %v544 = vpop.f32.mrb[0].mxu0
        %v545 = vadd.f32 %v467, %v544
        %v546 = vpop.f32.mrb[0].mxu0
        %547 = vdwg.mxu0
        %548 = vmatprep.subr.mxu0 0.0
        %549 = vmatpush1.msra.mxu0 %v288
        %550 = vmatprep.subr.mxu0 0.0
        %551 = vmatpush1.msra.mxu0 %v289
        %552 = vmatprep.subr.mxu0 0.0
        %553 = vmatpush1.msra.mxu0 %v290
        %554 = vmatprep.subr.mxu0 0.0
        %555 = vmatpush1.msra.mxu0 %v291
        %556 = vmatprep.subr.mxu0 0.0
        %557 = vmatpush1.msra.mxu0 %v292
        %558 = vmatprep.subr.mxu0 0.0
        %559 = vmatpush1.msra.mxu0 %v293
        %560 = vmatprep.subr.mxu0 0.0
        %561 = vmatpush1.msra.mxu0 0.0
        %562 = vmatprep.subr.mxu0 0.0
        %563 = vmatpush1.msra.mxu0 0.0
        %564 = vmatprep.subr.mxu0 0.0
        %565 = vmatpush1.msra.mxu0 0.0
        %566 = vmatprep.subr.mxu0 0.0
        %567 = vmatpush1.msra.mxu0 0.0
        %568 = vmatprep.subr.mxu0 0.0
        %569 = vmatpush1.msra.mxu0 0.0
        %570 = vmatprep.subr.mxu0 0.0
        %571 = vmatpush1.msra.mxu0 0.0
        %572 = vmatprep.subr.mxu0 0.0
        %573 = vmatpush1.msra.mxu0 0.0
        %574 = vmatprep.subr.mxu0 0.0
        %575 = vmatpush1.msra.mxu0 0.0
        %576 = vmatprep.subr.mxu0 0.0
        %577 = vmatpush1.msra.mxu0 0.0
        %578 = vmatprep.subr.mxu0 0.0
        %579 = vmatpush1.msra.mxu0 0.0
        %580 = vmatprep.subr.mxu0 0.0
        %581 = vmatpush1.msra.mxu0 0.0
        %582 = vmatprep.subr.mxu0 0.0
        %583 = vmatpush1.msra.mxu0 0.0
        %584 = vmatprep.subr.mxu0 0.0
        %585 = vmatpush1.msra.mxu0 0.0
        %586 = vmatprep.subr.mxu0 0.0
        %587 = vmatpush1.msra.mxu0 0.0
        %588 = vmatprep.subr.mxu0 0.0
        %589 = vmatpush1.msra.mxu0 0.0
        %590 = vmatprep.subr.mxu0 0.0
        %591 = vmatpush1.msra.mxu0 0.0
        %592 = vmatprep.subr.mxu0 0.0
        %593 = vmatpush1.msra.mxu0 0.0
        %594 = vmatprep.subr.mxu0 0.0
        %595 = vmatpush1.msra.mxu0 0.0
        %596 = vmatprep.subr.mxu0 0.0
        %597 = vmatpush1.msra.mxu0 0.0
        %598 = vmatprep.subr.mxu0 0.0
        %599 = vmatpush1.msra.mxu0 0.0
        %600 = vmatprep.subr.mxu0 0.0
        %601 = vmatpush1.msra.mxu0 0.0
        %602 = vmatprep.subr.mxu0 0.0
        %603 = vmatpush1.msra.mxu0 0.0
        %604 = vmatprep.subr.mxu0 0.0
        %605 = vmatpush1.msra.mxu0 0.0
        %606 = vmatprep.subr.mxu0 0.0
        %607 = vmatpush1.msra.mxu0 0.0
        %608 = vmatprep.subr.mxu0 0.0
        %609 = vmatpush1.msra.mxu0 0.0
        %610 = vmatprep.subr.mxu0 0.0
        %611 = vmatpush1.msra.mxu0 0.0
        %612 = vmatprep.mubr.f32.mxu0 0.0
        %v613 = vand.u32 %v298, 4294901760
        %v614 = vsub.f32 %v298, %v613
        %v615 = vand.u32 %v614, 4294901760
        %616 = vmatmul.mubr.f32.gmra.mrb[0].mxu0 %v615
        %v617 = vpop.f32.mrb[0].mxu0
        %v618 = vadd.f32 %v545, %v617
        %v619 = vpop.f32.mrb[0].mxu0
        %620 = vdwg.mxu0
        %621 = vmatprep.subr.mxu0 0.0
        %v622 = vsub.f32 %v288, %v288
        %v623 = vand.u32 %v622, 4294901760
        %624 = vmatpush1.msra.mxu0 %v623
        %625 = vmatprep.subr.mxu0 0.0
        %v626 = vsub.f32 %v289, %v289
        %v627 = vand.u32 %v626, 4294901760
        %628 = vmatpush1.msra.mxu0 %v627
        %629 = vmatprep.subr.mxu0 0.0
        %v630 = vsub.f32 %v290, %v290
        %v631 = vand.u32 %v630, 4294901760
        %632 = vmatpush1.msra.mxu0 %v631
        %633 = vmatprep.subr.mxu0 0.0
        %v634 = vsub.f32 %v291, %v291
        %v635 = vand.u32 %v634, 4294901760
        %636 = vmatpush1.msra.mxu0 %v635
        %637 = vmatprep.subr.mxu0 0.0
        %v638 = vsub.f32 %v292, %v292
        %v639 = vand.u32 %v638, 4294901760
        %640 = vmatpush1.msra.mxu0 %v639
        %641 = vmatprep.subr.mxu0 0.0
        %v642 = vsub.f32 %v293, %v293
        %v643 = vand.u32 %v642, 4294901760
        %644 = vmatpush1.msra.mxu0 %v643
        %645 = vmatprep.subr.mxu0 0.0
        %646 = vmatpush1.msra.mxu0 0.0
        %647 = vmatprep.subr.mxu0 0.0
        %648 = vmatpush1.msra.mxu0 0.0
        %649 = vmatprep.subr.mxu0 0.0
        %650 = vmatpush1.msra.mxu0 0.0
        %651 = vmatprep.subr.mxu0 0.0
        %652 = vmatpush1.msra.mxu0 0.0
        %653 = vmatprep.subr.mxu0 0.0
        %654 = vmatpush1.msra.mxu0 0.0
        %655 = vmatprep.subr.mxu0 0.0
        %656 = vmatpush1.msra.mxu0 0.0
        %657 = vmatprep.subr.mxu0 0.0
        %658 = vmatpush1.msra.mxu0 0.0
        %659 = vmatprep.subr.mxu0 0.0
        %660 = vmatpush1.msra.mxu0 0.0
        %661 = vmatprep.subr.mxu0 0.0
        %662 = vmatpush1.msra.mxu0 0.0
        %663 = vmatprep.subr.mxu0 0.0
        %664 = vmatpush1.msra.mxu0 0.0
        %665 = vmatprep.subr.mxu0 0.0
        %666 = vmatpush1.msra.mxu0 0.0
        %667 = vmatprep.subr.mxu0 0.0
        %668 = vmatpush1.msra.mxu0 0.0
        %669 = vmatprep.subr.mxu0 0.0
        %670 = vmatpush1.msra.mxu0 0.0
        %671 = vmatprep.subr.mxu0 0.0
        %672 = vmatpush1.msra.mxu0 0.0
        %673 = vmatprep.subr.mxu0 0.0
        %674 = vmatpush1.msra.mxu0 0.0
        %675 = vmatprep.subr.mxu0 0.0
        %676 = vmatpush1.msra.mxu0 0.0
        %677 = vmatprep.subr.mxu0 0.0
        %678 = vmatpush1.msra.mxu0 0.0
        %679 = vmatprep.subr.mxu0 0.0
        %680 = vmatpush1.msra.mxu0 0.0
        %681 = vmatprep.subr.mxu0 0.0
        %682 = vmatpush1.msra.mxu0 0.0
        %683 = vmatprep.subr.mxu0 0.0
        %684 = vmatpush1.msra.mxu0 0.0
        %685 = vmatprep.subr.mxu0 0.0
        %686 = vmatpush1.msra.mxu0 0.0
        %687 = vmatprep.subr.mxu0 0.0
        %688 = vmatpush1.msra.mxu0 0.0
        %689 = vmatprep.subr.mxu0 0.0
        %690 = vmatpush1.msra.mxu0 0.0
        %691 = vmatprep.subr.mxu0 0.0
        %692 = vmatpush1.msra.mxu0 0.0
        %693 = vmatprep.subr.mxu0 0.0
        %694 = vmatpush1.msra.mxu0 0.0
        %695 = vmatprep.subr.mxu0 0.0
        %696 = vmatpush1.msra.mxu0 0.0
        %697 = vmatprep.mubr.f32.mxu0 0.0
        %v698 = vand.u32 %v298, 4294901760
        %699 = vmatmul.mubr.f32.gmra.mrb[0].mxu0 %v698
        %v700 = vpop.f32.mrb[0].mxu0
        %v701 = vadd.f32 %v618, %v700
        %v702 = vpop.f32.mrb[0].mxu0
        %703 = vdwg.mxu0
        %704 = vmatprep.subr.mxu0 0.0
        %705 = vmatpush1.msra.mxu0 %v288
        %706 = vmatprep.subr.mxu0 0.0
        %707 = vmatpush1.msra.mxu0 %v289
        %708 = vmatprep.subr.mxu0 0.0
        %709 = vmatpush1.msra.mxu0 %v290
        %710 = vmatprep.subr.mxu0 0.0
        %711 = vmatpush1.msra.mxu0 %v291
        %712 = vmatprep.subr.mxu0 0.0
        %713 = vmatpush1.msra.mxu0 %v292
        %714 = vmatprep.subr.mxu0 0.0
        %715 = vmatpush1.msra.mxu0 %v293
        %716 = vmatprep.subr.mxu0 0.0
        %717 = vmatpush1.msra.mxu0 0.0
        %718 = vmatprep.subr.mxu0 0.0
        %719 = vmatpush1.msra.mxu0 0.0
        %720 = vmatprep.subr.mxu0 0.0
        %721 = vmatpush1.msra.mxu0 0.0
        %722 = vmatprep.subr.mxu0 0.0
        %723 = vmatpush1.msra.mxu0 0.0
        %724 = vmatprep.subr.mxu0 0.0
        %725 = vmatpush1.msra.mxu0 0.0
        %726 = vmatprep.subr.mxu0 0.0
        %727 = vmatpush1.msra.mxu0 0.0
        %728 = vmatprep.subr.mxu0 0.0
        %729 = vmatpush1.msra.mxu0 0.0
        %730 = vmatprep.subr.mxu0 0.0
        %731 = vmatpush1.msra.mxu0 0.0
        %732 = vmatprep.subr.mxu0 0.0
        %733 = vmatpush1.msra.mxu0 0.0
        %734 = vmatprep.subr.mxu0 0.0
        %735 = vmatpush1.msra.mxu0 0.0
        %736 = vmatprep.subr.mxu0 0.0
        %737 = vmatpush1.msra.mxu0 0.0
        %738 = vmatprep.subr.mxu0 0.0
        %739 = vmatpush1.msra.mxu0 0.0
        %740 = vmatprep.subr.mxu0 0.0
        %741 = vmatpush1.msra.mxu0 0.0
        %742 = vmatprep.subr.mxu0 0.0
        %743 = vmatpush1.msra.mxu0 0.0
        %744 = vmatprep.subr.mxu0 0.0
        %745 = vmatpush1.msra.mxu0 0.0
        %746 = vmatprep.subr.mxu0 0.0
        %747 = vmatpush1.msra.mxu0 0.0
        %748 = vmatprep.subr.mxu0 0.0
        %749 = vmatpush1.msra.mxu0 0.0
        %750 = vmatprep.subr.mxu0 0.0
        %751 = vmatpush1.msra.mxu0 0.0
        %752 = vmatprep.subr.mxu0 0.0
        %753 = vmatpush1.msra.mxu0 0.0
        %754 = vmatprep.subr.mxu0 0.0
        %755 = vmatpush1.msra.mxu0 0.0
        %756 = vmatprep.subr.mxu0 0.0
        %757 = vmatpush1.msra.mxu0 0.0
        %758 = vmatprep.subr.mxu0 0.0
        %759 = vmatpush1.msra.mxu0 0.0
        %760 = vmatprep.subr.mxu0 0.0
        %761 = vmatpush1.msra.mxu0 0.0
        %762 = vmatprep.subr.mxu0 0.0
        %763 = vmatpush1.msra.mxu0 0.0
        %764 = vmatprep.subr.mxu0 0.0
        %765 = vmatpush1.msra.mxu0 0.0
        %766 = vmatprep.subr.mxu0 0.0
        %767 = vmatpush1.msra.mxu0 0.0
        %768 = vmatprep.mubr.f32.mxu0 0.0
        %v769 = vand.u32 %v298, 4294901760
        %770 = vmatmul.mubr.f32.gmra.mrb[0].mxu0 %v769
        %v771 = vpop.f32.mrb[0].mxu0
        %v772 = vadd.f32 %v701, %v771
        %v773 = vpop.f32.mrb[0].mxu0
        %774 = vdwg.mxu0
        %vm775 = vcmask 261120
        %v777 = vsel %vm775, %v294, 0
        %779 = vmatprep.subr.mxu0 0.0
        %780 = vmatpush1.msra.mxu0 %v272
        %781 = vmatprep.subr.mxu0 0.0
        %782 = vmatpush1.msra.mxu0 %v273
        %783 = vmatprep.subr.mxu0 0.0
        %784 = vmatpush1.msra.mxu0 %v274
        %785 = vmatprep.subr.mxu0 0.0
        %786 = vmatpush1.msra.mxu0 %v275
        %787 = vmatprep.subr.mxu0 0.0
        %788 = vmatpush1.msra.mxu0 0.0
        %789 = vmatprep.subr.mxu0 0.0
        %790 = vmatpush1.msra.mxu0 0.0
        %791 = vmatprep.subr.mxu0 0.0
        %792 = vmatpush1.msra.mxu0 0.0
        %793 = vmatprep.subr.mxu0 0.0
        %794 = vmatpush1.msra.mxu0 0.0
        %795 = vmatprep.subr.mxu0 0.0
        %796 = vmatpush1.msra.mxu0 0.0
        %797 = vmatprep.subr.mxu0 0.0
        %798 = vmatpush1.msra.mxu0 0.0
        %799 = vmatprep.subr.mxu0 0.0
        %800 = vmatpush1.msra.mxu0 0.0
        %801 = vmatprep.subr.mxu0 0.0
        %802 = vmatpush1.msra.mxu0 0.0
        %803 = vmatprep.subr.mxu0 0.0
        %804 = vmatpush1.msra.mxu0 0.0
        %805 = vmatprep.subr.mxu0 0.0
        %806 = vmatpush1.msra.mxu0 0.0
        %807 = vmatprep.subr.mxu0 0.0
        %808 = vmatpush1.msra.mxu0 0.0
        %809 = vmatprep.subr.mxu0 0.0
        %810 = vmatpush1.msra.mxu0 0.0
        %811 = vmatprep.subr.mxu0 0.0
        %812 = vmatpush1.msra.mxu0 0.0
        %813 = vmatprep.subr.mxu0 0.0
        %814 = vmatpush1.msra.mxu0 0.0
        %815 = vmatprep.subr.mxu0 0.0
        %816 = vmatpush1.msra.mxu0 0.0
        %817 = vmatprep.subr.mxu0 0.0
        %818 = vmatpush1.msra.mxu0 0.0
        %819 = vmatprep.subr.mxu0 0.0
        %820 = vmatpush1.msra.mxu0 0.0
        %821 = vmatprep.subr.mxu0 0.0
        %822 = vmatpush1.msra.mxu0 0.0
        %823 = vmatprep.subr.mxu0 0.0
        %824 = vmatpush1.msra.mxu0 0.0
        %825 = vmatprep.subr.mxu0 0.0
        %826 = vmatpush1.msra.mxu0 0.0
        %827 = vmatprep.subr.mxu0 0.0
        %828 = vmatpush1.msra.mxu0 0.0
        %829 = vmatprep.subr.mxu0 0.0
        %830 = vmatpush1.msra.mxu0 0.0
        %831 = vmatprep.subr.mxu0 0.0
        %832 = vmatpush1.msra.mxu0 0.0
        %833 = vmatprep.subr.mxu0 0.0
        %834 = vmatpush1.msra.mxu0 0.0
        %835 = vmatprep.subr.mxu0 0.0
        %836 = vmatpush1.msra.mxu0 0.0
        %837 = vmatprep.subr.mxu0 0.0
        %838 = vmatpush1.msra.mxu0 0.0
        %839 = vmatprep.subr.mxu0 0.0
        %840 = vmatpush1.msra.mxu0 0.0
        %841 = vmatprep.subr.mxu0 0.0
        %842 = vmatpush1.msra.mxu0 0.0
        %843 = vmatprep.mubr.f32.mxu0 0.0
        %v844 = vand.u32 %v777, 4294901760
        %v845 = vsub.f32 %v777, %v844
        %v846 = vand.u32 %v845, 4294901760
        %v847 = vsub.f32 %v845, %v846
        %v848 = vand.u32 %v847, 4294901760
        %849 = vmatmul.mubr.f32.gmra.mrb[0].mxu0 %v848
        %v850 = vpop.f32.mrb[0].mxu0
        %v851 = vadd.f32 %v772, %v850
        %v852 = vpop.f32.mrb[0].mxu0
        %853 = vdwg.mxu0
        %854 = vmatprep.subr.mxu0 0.0
        %v855 = vsub.f32 %v272, %v272
        %v856 = vand.u32 %v855, 4294901760
        %v857 = vsub.f32 %v855, %v856
        %v858 = vand.u32 %v857, 4294901760
        %859 = vmatpush1.msra.mxu0 %v858
        %860 = vmatprep.subr.mxu0 0.0
        %v861 = vsub.f32 %v273, %v273
        %v862 = vand.u32 %v861, 4294901760
        %v863 = vsub.f32 %v861, %v862
        %v864 = vand.u32 %v863, 4294901760
        %865 = vmatpush1.msra.mxu0 %v864
        %866 = vmatprep.subr.mxu0 0.0
        %v867 = vsub.f32 %v274, %v274
        %v868 = vand.u32 %v867, 4294901760
        %v869 = vsub.f32 %v867, %v868
        %v870 = vand.u32 %v869, 4294901760
        %871 = vmatpush1.msra.mxu0 %v870
        %872 = vmatprep.subr.mxu0 0.0
        %v873 = vsub.f32 %v275, %v275
        %v874 = vand.u32 %v873, 4294901760
        %v875 = vsub.f32 %v873, %v874
        %v876 = vand.u32 %v875, 4294901760
        %877 = vmatpush1.msra.mxu0 %v876
        %878 = vmatprep.subr.mxu0 0.0
        %879 = vmatpush1.msra.mxu0 0.0
        %880 = vmatprep.subr.mxu0 0.0
        %881 = vmatpush1.msra.mxu0 0.0
        %882 = vmatprep.subr.mxu0 0.0
        %883 = vmatpush1.msra.mxu0 0.0
        %884 = vmatprep.subr.mxu0 0.0
        %885 = vmatpush1.msra.mxu0 0.0
        %886 = vmatprep.subr.mxu0 0.0
        %887 = vmatpush1.msra.mxu0 0.0
        %888 = vmatprep.subr.mxu0 0.0
        %889 = vmatpush1.msra.mxu0 0.0
        %890 = vmatprep.subr.mxu0 0.0
        %891 = vmatpush1.msra.mxu0 0.0
        %892 = vmatprep.subr.mxu0 0.0
        %893 = vmatpush1.msra.mxu0 0.0
        %894 = vmatprep.subr.mxu0 0.0
        %895 = vmatpush1.msra.mxu0 0.0
        %896 = vmatprep.subr.mxu0 0.0
        %897 = vmatpush1.msra.mxu0 0.0
        %898 = vmatprep.subr.mxu0 0.0
        %899 = vmatpush1.msra.mxu0 0.0
        %900 = vmatprep.subr.mxu0 0.0
        %901 = vmatpush1.msra.mxu0 0.0
        %902 = vmatprep.subr.mxu0 0.0
        %903 = vmatpush1.msra.mxu0 0.0
        %904 = vmatprep.subr.mxu0 0.0
        %905 = vmatpush1.msra.mxu0 0.0
        %906 = vmatprep.subr.mxu0 0.0
        %907 = vmatpush1.msra.mxu0 0.0
        %908 = vmatprep.subr.mxu0 0.0
        %909 = vmatpush1.msra.mxu0 0.0
        %910 = vmatprep.subr.mxu0 0.0
        %911 = vmatpush1.msra.mxu0 0.0
        %912 = vmatprep.subr.mxu0 0.0
        %913 = vmatpush1.msra.mxu0 0.0
        %914 = vmatprep.subr.mxu0 0.0
        %915 = vmatpush1.msra.mxu0 0.0
        %916 = vmatprep.subr.mxu0 0.0
        %917 = vmatpush1.msra.mxu0 0.0
        %918 = vmatprep.subr.mxu0 0.0
        %919 = vmatpush1.msra.mxu0 0.0
        %920 = vmatprep.subr.mxu0 0.0
        %921 = vmatpush1.msra.mxu0 0.0
        %922 = vmatprep.subr.mxu0 0.0
        %923 = vmatpush1.msra.mxu0 0.0
        %924 = vmatprep.subr.mxu0 0.0
        %925 = vmatpush1.msra.mxu0 0.0
        %926 = vmatprep.subr.mxu0 0.0
        %927 = vmatpush1.msra.mxu0 0.0
        %928 = vmatprep.subr.mxu0 0.0
        %929 = vmatpush1.msra.mxu0 0.0
        %930 = vmatprep.subr.mxu0 0.0
        %931 = vmatpush1.msra.mxu0 0.0
        %932 = vmatprep.subr.mxu0 0.0
        %933 = vmatpush1.msra.mxu0 0.0
        %934 = vmatprep.mubr.f32.mxu0 0.0
        %v935 = vand.u32 %v777, 4294901760
        %936 = vmatmul.mubr.f32.gmra.mrb[0].mxu0 %v935
        %v937 = vpop.f32.mrb[0].mxu0
        %v938 = vadd.f32 %v851, %v937
        %v939 = vpop.f32.mrb[0].mxu0
        %940 = vdwg.mxu0
        %941 = vmatprep.subr.mxu0 0.0
        %v942 = vsub.f32 %v272, %v272
        %943 = vmatpush1.msra.mxu0 %v942
        %944 = vmatprep.subr.mxu0 0.0
        %v945 = vsub.f32 %v273, %v273
        %946 = vmatpush1.msra.mxu0 %v945
        %947 = vmatprep.subr.mxu0 0.0
        %v948 = vsub.f32 %v274, %v274
        %949 = vmatpush1.msra.mxu0 %v948
        %950 = vmatprep.subr.mxu0 0.0
        %v951 = vsub.f32 %v275, %v275
        %952 = vmatpush1.msra.mxu0 %v951
        %953 = vmatprep.subr.mxu0 0.0
        %954 = vmatpush1.msra.mxu0 0.0
        %955 = vmatprep.subr.mxu0 0.0
        %956 = vmatpush1.msra.mxu0 0.0
        %957 = vmatprep.subr.mxu0 0.0
        %958 = vmatpush1.msra.mxu0 0.0
        %959 = vmatprep.subr.mxu0 0.0
        %960 = vmatpush1.msra.mxu0 0.0
        %961 = vmatprep.subr.mxu0 0.0
        %962 = vmatpush1.msra.mxu0 0.0
        %963 = vmatprep.subr.mxu0 0.0
        %964 = vmatpush1.msra.mxu0 0.0
        %965 = vmatprep.subr.mxu0 0.0
        %966 = vmatpush1.msra.mxu0 0.0
        %967 = vmatprep.subr.mxu0 0.0
        %968 = vmatpush1.msra.mxu0 0.0
        %969 = vmatprep.subr.mxu0 0.0
        %970 = vmatpush1.msra.mxu0 0.0
        %971 = vmatprep.subr.mxu0 0.0
        %972 = vmatpush1.msra.mxu0 0.0
        %973 = vmatprep.subr.mxu0 0.0
        %974 = vmatpush1.msra.mxu0 0.0
        %975 = vmatprep.subr.mxu0 0.0
        %976 = vmatpush1.msra.mxu0 0.0
        %977 = vmatprep.subr.mxu0 0.0
        %978 = vmatpush1.msra.mxu0 0.0
        %979 = vmatprep.subr.mxu0 0.0
        %980 = vmatpush1.msra.mxu0 0.0
        %981 = vmatprep.subr.mxu0 0.0
        %982 = vmatpush1.msra.mxu0 0.0
        %983 = vmatprep.subr.mxu0 0.0
        %984 = vmatpush1.msra.mxu0 0.0
        %985 = vmatprep.subr.mxu0 0.0
        %986 = vmatpush1.msra.mxu0 0.0
        %987 = vmatprep.subr.mxu0 0.0
        %988 = vmatpush1.msra.mxu0 0.0
        %989 = vmatprep.subr.mxu0 0.0
        %990 = vmatpush1.msra.mxu0 0.0
        %991 = vmatprep.subr.mxu0 0.0
        %992 = vmatpush1.msra.mxu0 0.0
        %993 = vmatprep.subr.mxu0 0.0
        %994 = vmatpush1.msra.mxu0 0.0
        %995 = vmatprep.subr.mxu0 0.0
        %996 = vmatpush1.msra.mxu0 0.0
        %997 = vmatprep.subr.mxu0 0.0
        %998 = vmatpush1.msra.mxu0 0.0
        %999 = vmatprep.subr.mxu0 0.0
        %1000 = vmatpush1.msra.mxu0 0.0
        %1001 = vmatprep.subr.mxu0 0.0
        %1002 = vmatpush1.msra.mxu0 0.0
        %1003 = vmatprep.subr.mxu0 0.0
        %1004 = vmatpush1.msra.mxu0 0.0
        %1005 = vmatprep.subr.mxu0 0.0
        %1006 = vmatpush1.msra.mxu0 0.0
        %1007 = vmatprep.subr.mxu0 0.0
        %1008 = vmatpush1.msra.mxu0 0.0
        %1009 = vmatprep.mubr.f32.mxu0 0.0
        %v1010 = vand.u32 %v777, 4294901760
        %v1011 = vsub.f32 %v777, %v1010
        %1012 = vmatmul.mubr.f32.gmra.mrb[0].mxu0 %v1011
        %v1013 = vpop.f32.mrb[0].mxu0
        %v1014 = vadd.f32 %v938, %v1013
        %v1015 = vpop.f32.mrb[0].mxu0
        %1016 = vdwg.mxu0
        %1017 = vmatprep.subr.mxu0 0.0
        %1018 = vmatpush1.msra.mxu0 %v272
        %1019 = vmatprep.subr.mxu0 0.0
        %1020 = vmatpush1.msra.mxu0 %v273
        %1021 = vmatprep.subr.mxu0 0.0
        %1022 = vmatpush1.msra.mxu0 %v274
        %1023 = vmatprep.subr.mxu0 0.0
        %1024 = vmatpush1.msra.mxu0 %v275
        %1025 = vmatprep.subr.mxu0 0.0
        %1026 = vmatpush1.msra.mxu0 0.0
        %1027 = vmatprep.subr.mxu0 0.0
        %1028 = vmatpush1.msra.mxu0 0.0
        %1029 = vmatprep.subr.mxu0 0.0
        %1030 = vmatpush1.msra.mxu0 0.0
        %1031 = vmatprep.subr.mxu0 0.0
        %1032 = vmatpush1.msra.mxu0 0.0
        %1033 = vmatprep.subr.mxu0 0.0
        %1034 = vmatpush1.msra.mxu0 0.0
        %1035 = vmatprep.subr.mxu0 0.0
        %1036 = vmatpush1.msra.mxu0 0.0
        %1037 = vmatprep.subr.mxu0 0.0
        %1038 = vmatpush1.msra.mxu0 0.0
        %1039 = vmatprep.subr.mxu0 0.0
        %1040 = vmatpush1.msra.mxu0 0.0
        %1041 = vmatprep.subr.mxu0 0.0
        %1042 = vmatpush1.msra.mxu0 0.0
        %1043 = vmatprep.subr.mxu0 0.0
        %1044 = vmatpush1.msra.mxu0 0.0
        %1045 = vmatprep.subr.mxu0 0.0
        %1046 = vmatpush1.msra.mxu0 0.0
        %1047 = vmatprep.subr.mxu0 0.0
        %1048 = vmatpush1.msra.mxu0 0.0
        %1049 = vmatprep.subr.mxu0 0.0
        %1050 = vmatpush1.msra.mxu0 0.0
        %1051 = vmatprep.subr.mxu0 0.0
        %1052 = vmatpush1.msra.mxu0 0.0
        %1053 = vmatprep.subr.mxu0 0.0
        %1054 = vmatpush1.msra.mxu0 0.0
        %1055 = vmatprep.subr.mxu0 0.0
        %1056 = vmatpush1.msra.mxu0 0.0
        %1057 = vmatprep.subr.mxu0 0.0
        %1058 = vmatpush1.msra.mxu0 0.0
        %1059 = vmatprep.subr.mxu0 0.0
        %1060 = vmatpush1.msra.mxu0 0.0
        %1061 = vmatprep.subr.mxu0 0.0
        %1062 = vmatpush1.msra.mxu0 0.0
        %1063 = vmatprep.subr.mxu0 0.0
        %1064 = vmatpush1.msra.mxu0 0.0
        %1065 = vmatprep.subr.mxu0 0.0
        %1066 = vmatpush1.msra.mxu0 0.0
        %1067 = vmatprep.subr.mxu0 0.0
        %1068 = vmatpush1.msra.mxu0 0.0
        %1069 = vmatprep.subr.mxu0 0.0
        %1070 = vmatpush1.msra.mxu0 0.0
        %1071 = vmatprep.subr.mxu0 0.0
        %1072 = vmatpush1.msra.mxu0 0.0
        %1073 = vmatprep.subr.mxu0 0.0
        %1074 = vmatpush1.msra.mxu0 0.0
        %1075 = vmatprep.subr.mxu0 0.0
        %1076 = vmatpush1.msra.mxu0 0.0
        %1077 = vmatprep.subr.mxu0 0.0
        %1078 = vmatpush1.msra.mxu0 0.0
        %1079 = vmatprep.subr.mxu0 0.0
        %1080 = vmatpush1.msra.mxu0 0.0
        %1081 = vmatprep.mubr.f32.mxu0 0.0
        %v1082 = vand.u32 %v777, 4294901760
        %v1083 = vsub.f32 %v777, %v1082
        %v1084 = vand.u32 %v1083, 4294901760
        %1085 = vmatmul.mubr.f32.gmra.mrb[0].mxu0 %v1084
        %v1086 = vpop.f32.mrb[0].mxu0
        %v1087 = vadd.f32 %v1014, %v1086
        %v1088 = vpop.f32.mrb[0].mxu0
        %1089 = vdwg.mxu0
        %1090 = vmatprep.subr.mxu0 0.0
        %v1091 = vsub.f32 %v272, %v272
        %v1092 = vand.u32 %v1091, 4294901760
        %1093 = vmatpush1.msra.mxu0 %v1092
        %1094 = vmatprep.subr.mxu0 0.0
        %v1095 = vsub.f32 %v273, %v273
        %v1096 = vand.u32 %v1095, 4294901760
        %1097 = vmatpush1.msra.mxu0 %v1096
        %1098 = vmatprep.subr.mxu0 0.0
        %v1099 = vsub.f32 %v274, %v274
        %v1100 = vand.u32 %v1099, 4294901760
        %1101 = vmatpush1.msra.mxu0 %v1100
        %1102 = vmatprep.subr.mxu0 0.0
        %v1103 = vsub.f32 %v275, %v275
        %v1104 = vand.u32 %v1103, 4294901760
        %1105 = vmatpush1.msra.mxu0 %v1104
        %1106 = vmatprep.subr.mxu0 0.0
        %1107 = vmatpush1.msra.mxu0 0.0
        %1108 = vmatprep.subr.mxu0 0.0
        %1109 = vmatpush1.msra.mxu0 0.0
        %1110 = vmatprep.subr.mxu0 0.0
        %1111 = vmatpush1.msra.mxu0 0.0
        %1112 = vmatprep.subr.mxu0 0.0
        %1113 = vmatpush1.msra.mxu0 0.0
        %1114 = vmatprep.subr.mxu0 0.0
        %1115 = vmatpush1.msra.mxu0 0.0
        %1116 = vmatprep.subr.mxu0 0.0
        %1117 = vmatpush1.msra.mxu0 0.0
        %1118 = vmatprep.subr.mxu0 0.0
        %1119 = vmatpush1.msra.mxu0 0.0
        %1120 = vmatprep.subr.mxu0 0.0
        %1121 = vmatpush1.msra.mxu0 0.0
        %1122 = vmatprep.subr.mxu0 0.0
        %1123 = vmatpush1.msra.mxu0 0.0
        %1124 = vmatprep.subr.mxu0 0.0
        %1125 = vmatpush1.msra.mxu0 0.0
        %1126 = vmatprep.subr.mxu0 0.0
        %1127 = vmatpush1.msra.mxu0 0.0
        %1128 = vmatprep.subr.mxu0 0.0
        %1129 = vmatpush1.msra.mxu0 0.0
        %1130 = vmatprep.subr.mxu0 0.0
        %1131 = vmatpush1.msra.mxu0 0.0
        %1132 = vmatprep.subr.mxu0 0.0
        %1133 = vmatpush1.msra.mxu0 0.0
        %1134 = vmatprep.subr.mxu0 0.0
        %1135 = vmatpush1.msra.mxu0 0.0
        %1136 = vmatprep.subr.mxu0 0.0
        %1137 = vmatpush1.msra.mxu0 0.0
        %1138 = vmatprep.subr.mxu0 0.0
        %1139 = vmatpush1.msra.mxu0 0.0
        %1140 = vmatprep.subr.mxu0 0.0
        %1141 = vmatpush1.msra.mxu0 0.0
        %1142 = vmatprep.subr.mxu0 0.0
        %1143 = vmatpush1.msra.mxu0 0.0
        %1144 = vmatprep.subr.mxu0 0.0
        %1145 = vmatpush1.msra.mxu0 0.0
        %1146 = vmatprep.subr.mxu0 0.0
        %1147 = vmatpush1.msra.mxu0 0.0
        %1148 = vmatprep.subr.mxu0 0.0
        %1149 = vmatpush1.msra.mxu0 0.0
        %1150 = vmatprep.subr.mxu0 0.0
        %1151 = vmatpush1.msra.mxu0 0.0
        %1152 = vmatprep.subr.mxu0 0.0
        %1153 = vmatpush1.msra.mxu0 0.0
        %1154 = vmatprep.subr.mxu0 0.0
        %1155 = vmatpush1.msra.mxu0 0.0
        %1156 = vmatprep.subr.mxu0 0.0
        %1157 = vmatpush1.msra.mxu0 0.0
        %1158 = vmatprep.subr.mxu0 0.0
        %1159 = vmatpush1.msra.mxu0 0.0
        %1160 = vmatprep.subr.mxu0 0.0
        %1161 = vmatpush1.msra.mxu0 0.0
        %1162 = vmatprep.mubr.f32.mxu0 0.0
        %v1163 = vand.u32 %v777, 4294901760
        %1164 = vmatmul.mubr.f32.gmra.mrb[0].mxu0 %v1163
        %v1165 = vpop.f32.mrb[0].mxu0
        %v1166 = vadd.f32 %v1087, %v1165
        %v1167 = vpop.f32.mrb[0].mxu0
        %1168 = vdwg.mxu0
        %1169 = vmatprep.subr.mxu0 0.0
        %1170 = vmatpush1.msra.mxu0 %v272
        %1171 = vmatprep.subr.mxu0 0.0
        %1172 = vmatpush1.msra.mxu0 %v273
        %1173 = vmatprep.subr.mxu0 0.0
        %1174 = vmatpush1.msra.mxu0 %v274
        %1175 = vmatprep.subr.mxu0 0.0
        %1176 = vmatpush1.msra.mxu0 %v275
        %1177 = vmatprep.subr.mxu0 0.0
        %1178 = vmatpush1.msra.mxu0 0.0
        %1179 = vmatprep.subr.mxu0 0.0
        %1180 = vmatpush1.msra.mxu0 0.0
        %1181 = vmatprep.subr.mxu0 0.0
        %1182 = vmatpush1.msra.mxu0 0.0
        %1183 = vmatprep.subr.mxu0 0.0
        %1184 = vmatpush1.msra.mxu0 0.0
        %1185 = vmatprep.subr.mxu0 0.0
        %1186 = vmatpush1.msra.mxu0 0.0
        %1187 = vmatprep.subr.mxu0 0.0
        %1188 = vmatpush1.msra.mxu0 0.0
        %1189 = vmatprep.subr.mxu0 0.0
        %1190 = vmatpush1.msra.mxu0 0.0
        %1191 = vmatprep.subr.mxu0 0.0
        %1192 = vmatpush1.msra.mxu0 0.0
        %1193 = vmatprep.subr.mxu0 0.0
        %1194 = vmatpush1.msra.mxu0 0.0
        %1195 = vmatprep.subr.mxu0 0.0
        %1196 = vmatpush1.msra.mxu0 0.0
        %1197 = vmatprep.subr.mxu0 0.0
        %1198 = vmatpush1.msra.mxu0 0.0
        %1199 = vmatprep.subr.mxu0 0.0
        %1200 = vmatpush1.msra.mxu0 0.0
        %1201 = vmatprep.subr.mxu0 0.0
        %1202 = vmatpush1.msra.mxu0 0.0
        %1203 = vmatprep.subr.mxu0 0.0
        %1204 = vmatpush1.msra.mxu0 0.0
        %1205 = vmatprep.subr.mxu0 0.0
        %1206 = vmatpush1.msra.mxu0 0.0
        %1207 = vmatprep.subr.mxu0 0.0
        %1208 = vmatpush1.msra.mxu0 0.0
        %1209 = vmatprep.subr.mxu0 0.0
        %1210 = vmatpush1.msra.mxu0 0.0
        %1211 = vmatprep.subr.mxu0 0.0
        %1212 = vmatpush1.msra.mxu0 0.0
        %1213 = vmatprep.subr.mxu0 0.0
        %1214 = vmatpush1.msra.mxu0 0.0
        %1215 = vmatprep.subr.mxu0 0.0
        %1216 = vmatpush1.msra.mxu0 0.0
        %1217 = vmatprep.subr.mxu0 0.0
        %1218 = vmatpush1.msra.mxu0 0.0
        %1219 = vmatprep.subr.mxu0 0.0
        %1220 = vmatpush1.msra.mxu0 0.0
        %1221 = vmatprep.subr.mxu0 0.0
        %1222 = vmatpush1.msra.mxu0 0.0
        %1223 = vmatprep.subr.mxu0 0.0
        %1224 = vmatpush1.msra.mxu0 0.0
        %1225 = vmatprep.subr.mxu0 0.0
        %1226 = vmatpush1.msra.mxu0 0.0
        %1227 = vmatprep.subr.mxu0 0.0
        %1228 = vmatpush1.msra.mxu0 0.0
        %1229 = vmatprep.subr.mxu0 0.0
        %1230 = vmatpush1.msra.mxu0 0.0
        %1231 = vmatprep.subr.mxu0 0.0
        %1232 = vmatpush1.msra.mxu0 0.0
        %1233 = vmatprep.mubr.f32.mxu0 0.0
        %v1234 = vand.u32 %v777, 4294901760
        %1235 = vmatmul.mubr.f32.gmra.mrb[0].mxu0 %v1234
        %v1236 = vpop.f32.mrb[0].mxu0
        %v1237 = vadd.f32 %v1166, %v1236
        %v1238 = vpop.f32.mrb[0].mxu0
        %1239 = vdwg.mxu0
        %v1240 = vld [vmem:[%s5] sm:$0x1f]
        %1242 = vset.pattern.permute.xlu0 0
        %1243 = vperm.xlu0 %1242, %v1240
        %v1244 = vpop.permute.xlu0 %1243
        %v1246 = vmax.f32 %v1237, %v1244
        %v1247 = vld [vmem:[%s4] sm:$0x1f]
        %1249 = vset.pattern.permute.xlu0 0
        %1250 = vperm.xlu0 %1249, %v1247
        %v1251 = vpop.permute.xlu0 %1250
        %v1253 = vmul.f32 %v1246, %v1251
        %vm1254 = vcmask 1044480
        %v1255 = vsel %vm1254, %v1253, 0.0
        %v1256 = vrot.slane %v1255, 4
        %v1257 = vadd.f32 %v1255, %v1256
        %v1258 = vrot.slane %v1257, 2
        %v1259 = vadd.f32 %v1257, %v1258
        %v1260 = vrot.slane %v1259, 1
        %v1261 = vadd.f32 %v1259, %v1260
        %1262 = vst [vmem:[%s250] sm:$0x1] %v1261
        %s1263 = sand.u32 %s164, 1
        %s1264 = scalar_lea.sflag [#allocation3], %s1263
        %s1265 = sand.u32 %s164, 1
        %s1266 = scalar_lea.vmem [#allocation2], %s1265
        // Predicated region
        $region45: #{ncf_ctw_forward.1} parent=43 // pred_check
          %p1267 = pneg %p174
        $region46: #{ncf_ctw_forward.1} parent=43 // pred_check_branch
          %1269 = sbr.rel (%p1267) target = $region48
        $region47: #{ncf_ctw_forward.1} parent=43 // pred_region
          %s1271 = ssub.s32 16, 16
          %1272 = vsyncadd %s1264, %s1271
          %s1273 = smul.addr %s20, 16
          %s1274 = scalar_lea.hbm %s6, %s1273
          %s1276 = sshll.u32 %s1266, 4
          %s1277 = int_to_ptr.vmem [resolvable:$true] %s1276
          %1279 = dma.vmem_to_hbm [thread:$0]  %s1277, 16, %s1274, %s1264
        $region48: #{ncf_ctw_forward.1} parent=43 // pred_fallthru
          _
      $region44: #{ncf_ctw_forward.1} parent=5 // pred_fallthru
        _
      %p1280 = scmp.le.s32.totalorder 2, %s15
      // Predicated region
      $region49: #{ncf_ctw_forward.1} parent=5 // pred_check
        %p1281 = pneg %p1280
      $region50: #{ncf_ctw_forward.1} parent=5 // pred_check_branch
        %1283 = sbr.rel (%p1281) target = $region52
      $region51: #{ncf_ctw_forward.1} parent=5 // pred_region
        %s1284 = ssub.s32 %s15, 2
        // Predicated region
        $region53: #{ncf_ctw_forward.1} parent=51 // pred_check
          %p1285 = pneg %p180
        $region54: #{ncf_ctw_forward.1} parent=51 // pred_check_branch
          %1287 = sbr.rel (%p1285) target = $region56
        $region55: #{ncf_ctw_forward.1} parent=51 // pred_region
          %s1288 = sand.u32 %s165, 1
          %s1289 = scalar_lea.sflag [#allocation3], %s1288
          %s1290 = sand.u32 %s165, 1
          %s1291 = scalar_lea.vmem [#allocation2], %s1290
          %1292 = dma.done %s1289, 16
        $region56: #{ncf_ctw_forward.1} parent=51 // pred_fallthru
          _
      $region52: #{ncf_ctw_forward.1} parent=5 // pred_fallthru
        _
    $region6: #{ncf_ctw_forward.1} parent=1 // loop_footer
      %s19 = sadd.s32 1, %s15
    $region7: #{ncf_ctw_forward.1} parent=1 // loop_footer_branch
      %14 = sbr.rel target = $region3
    $region8: #{ncf_ctw_forward.1} parent=1 // loop_exit
      _
    %1293 = vsyncpa [#allocation3], 1
    %s1294 = scalar_lea.sflag [#allocation3], 1
    %1295 = vsyncpa %s1294, 1

</llo_original>
